<compile_context>
chip_gen: v6e
topology: v6e:2x2x1
jax: 0.10.0
libtpu: 0.0.40
codegen_flags: <defaults>
</compile_context>

<pallas_src>
import jax
import jax.numpy as jnp
from jax.experimental import pallas as pl
from jax.experimental.pallas import tpu as pltpu


def _block_kernel(x_ref, last_ref, o_ref):
    # Pure VPU elementwise: (1 + x) * x_input[:, -1, :], clamped at 0.
    o_ref[...] = jnp.maximum((1.0 + x_ref[...]) * last_ref[...], 0.0)


def block_forward(x, x_input):
    """Pallas equivalent of Block.forward(x, x_input)."""
    B, F = x.shape
    assert x_input.shape[0] == B and x_input.shape[2] == F
    assert x_input.dtype == x.dtype

    # Only the last timestep is ever read -> slice it out before the kernel so
    # the pallas_call moves B*F elements instead of B*S*F.
    last = x_input[:, -1, :]                               # (B, F)

    # Lane-dense view: (rows, 128) when B*F allows, else F (full extent) on lanes.
    n = B * F
    if n % (8 * 128) == 0:
        rows, cols = n // 128, 128
    else:
        rows, cols = B, F
    x2 = x.reshape(rows, cols)
    last2 = last.reshape(rows, cols)

    # Row tile: full extent if it fits a ~1 MiB block, else a multiple-of-8 tile.
    # Working set = 3 arrays x 2 pipeline buffers x block  ->  <= ~6 MiB of VMEM.
    itemsize = jnp.dtype(x.dtype).itemsize
    target_block_bytes = 1 << 20
    tr_cap = max(8, (target_block_bytes // (cols * itemsize)) // 8 * 8)
    tr = rows if rows <= tr_cap else tr_cap
    grid = (pl.cdiv(rows, tr),)

    out2 = pl.pallas_call(
        _block_kernel,
        out_shape=jax.ShapeDtypeStruct((rows, cols), x.dtype),
        grid=grid,
        in_specs=[
            pl.BlockSpec((tr, cols), lambda i: (i, 0)),
            pl.BlockSpec((tr, cols), lambda i: (i, 0)),
        ],
        out_specs=pl.BlockSpec((tr, cols), lambda i: (i, 0)),
        compiler_params=pltpu.CompilerParams(
            dimension_semantics=("parallel",),
        ),
    )(x2, last2)

    return out2.reshape(B, F)


if __name__ == "__main__":
    # Block has no learnable parameters (empty __init__), so nothing to initialize.
    key = jax.random.PRNGKey(0)
    k1, k2, k3, k4 = jax.random.split(key, 4)

    # Small shapes matching the time-series module: (batch, seq, features).
    B, S, F = 2, 8, 32
    x = jax.random.normal(k1, (B, F), dtype=jnp.float32)
    x_input = jax.random.normal(k2, (B, S, F), dtype=jnp.float32)

    out = jax.block_until_ready(block_forward(x, x_input))
    ref = jnp.maximum((1.0 + x) * x_input[:, -1, :], 0.0)
    assert out.shape == (B, F)
    assert jnp.allclose(out, ref, atol=1e-6, rtol=1e-6)

    # Larger check exercising the lane-dense layout + multi-block grid
    # (grid = 3 blocks of 2048 rows, last block partial).
    B2, S2, F2 = 4104, 4, 128
    x_b = jax.random.normal(k3, (B2, F2), dtype=jnp.float32)
    xin_b = jax.random.normal(k4, (B2, S2, F2), dtype=jnp.float32)
    out_b = jax.block_until_ready(block_forward(x_b, xin_b))
    ref_b = jnp.maximum((1.0 + x_b) * xin_b[:, -1, :], 0.0)
    assert out_b.shape == (B2, F2)
    assert jnp.allclose(out_b, ref_b, atol=1e-6, rtol=1e-6)

    print("KERNEL_OK")
</pallas_src>

<mosaic_0001>
module attributes {stable_mosaic.version = 11 : i64} {
  func.func @_block_kernel(%arg0: i32, %arg1: memref<2x32xf32, #tpu.memory_space<vmem>>, %arg2: memref<2x32xf32, #tpu.memory_space<vmem>>, %arg3: memref<2x32xf32, #tpu.memory_space<vmem>>) attributes {dimension_semantics = [#tpu.dimension_semantics<parallel>], iteration_bounds = array<i64: 1>, scalar_prefetch = 0 : i64, scratch_operands = 0 : i64, tpu.core_type = #tpu.core_type<tc>, window_params = [{transform_indices = @transform_0, window_bounds = array<i64: 2, 32>}, {transform_indices = @transform_1, window_bounds = array<i64: 2, 32>}, {transform_indices = @transform_2, window_bounds = array<i64: 2, 32>}]} {
    %c0 = arith.constant 0 : index
    %c0_0 = arith.constant 0 : index
    %0 = vector.load %arg1[%c0, %c0_0] : memref<2x32xf32, #tpu.memory_space<vmem>>, vector<2x32xf32>
    %cst = arith.constant 1.000000e+00 : f32
    %1 = vector.broadcast %cst : f32 to vector<2x32xf32>
    %2 = arith.addf %1, %0 : vector<2x32xf32>
    %c0_1 = arith.constant 0 : index
    %c0_2 = arith.constant 0 : index
    %3 = vector.load %arg2[%c0_1, %c0_2] : memref<2x32xf32, #tpu.memory_space<vmem>>, vector<2x32xf32>
    %4 = arith.mulf %2, %3 : vector<2x32xf32>
    %cst_3 = arith.constant 0.000000e+00 : f32
    %5 = vector.broadcast %cst_3 : f32 to vector<2x32xf32>
    %6 = arith.maximumf %4, %5 : vector<2x32xf32>
    %c0_4 = arith.constant 0 : index
    %c0_5 = arith.constant 0 : index
    %7 = vector.load %arg3[%c0_4, %c0_5] : memref<2x32xf32, #tpu.memory_space<vmem>>, vector<2x32xf32>
    tpu.vector_store %arg3[%c0_4, %c0_5], %6 {strides = array<i32>} : memref<2x32xf32, #tpu.memory_space<vmem>>, vector<2x32xf32>,
    return
  }
  func.func @transform_0(%arg0: i32) -> (i32, i32) {
    %c0_i32 = arith.constant 0 : i32
    %c0_i32_0 = arith.constant 0 : i32
    return %arg0, %c0_i32 : i32, i32
  }
  func.func @transform_1(%arg0: i32) -> (i32, i32) {
    %c0_i32 = arith.constant 0 : i32
    %c0_i32_0 = arith.constant 0 : i32
    return %arg0, %c0_i32 : i32, i32
  }
  func.func @transform_2(%arg0: i32) -> (i32, i32) {
    %c0_i32 = arith.constant 0 : i32
    %c0_i32_0 = arith.constant 0 : i32
    return %arg0, %c0_i32 : i32, i32
  }
}

</mosaic_0001>

<llo_original>
// kernel: tpu_custom_call.1
$region0: #{tpu_custom_call.1}
  #allocation0 [shape = 'u32[]', space=smem, size = 0x4, offset = 0x4, fixed_abs, tag = 'smem constant byte address 0x4 - core index']
  #allocation1 [shape = 'u32[144,128]{1,0:T(1,128)}', space=vmem, size = 0x12000, scoped, tag = 'internal scratch']
  %s0 = inlined_call_operand.hbm [shape: f32[2,32], index: 0, kind: input, shape index: {}]
  %s1 = inlined_call_operand.hbm [shape: f32[2,32], index: 1, kind: input, shape index: {}]
  %s2 = inlined_call_operand.hbm [shape: f32[2,32], index: 2, kind: output, shape index: {}]
  %s3 = sld [smem:[#allocation0]]
  $region26: #{tpu_custom_call.1} parent=0
    _
  %s5 = ssub.s32 1, %s3
  %s6 = scalar_select 0, %s5, %s3
  $region1: #{tpu_custom_call.1} parent=0
    #allocation2 [shape = 'u8[1024]{0}', space=vmem, size = 0x400, scoped, tag = 'input window, operand 0, single buffered']
    #allocation3 [shape = 's32[1]{0}', space=sflag, size = 0x4, scoped, tag = 'scoped memory for tpu_custom_call.1']
    #allocation4 [shape = 's32[1]{0}', space=sflag, size = 0x4, scoped, tag = 'scoped memory for tpu_custom_call.1']
    #allocation5 [shape = 'u8[1024]{0}', space=vmem, size = 0x400, scoped, tag = 'input window, operand 1, single buffered']
    #allocation6 [shape = 's32[1]{0}', space=sflag, size = 0x4, scoped, tag = 'scoped memory for tpu_custom_call.1']
    #allocation7 [shape = 'u8[1024]{0}', space=vmem, size = 0x400, scoped, tag = 'output window, operand 0, single buffered']
    %7 = vsyncpa [#allocation3], 0
    %8 = vsyncpa [#allocation6], 0
    %9 = vsyncpa [#allocation4], 0
    // Predicated region
    $region2: #{tpu_custom_call.1} parent=1 // pred_check
      _
    $region3: #{tpu_custom_call.1} parent=1 // pred_check_branch
      %11 = sbr.rel (0) target = $region5
    $region4: #{tpu_custom_call.1} parent=1 // pred_region
      %s13 = ssub.s32 32, 32
      %14 = vsyncadd [#allocation3], %s13
      %s16 = sshll.u32 [#allocation2], 4
      %s17 = int_to_ptr.vmem [resolvable:$true] %s16
      %19 = dma.hbm_to_vmem [thread:$0]  %s0, 32, %s17, [#allocation3]
    $region5: #{tpu_custom_call.1} parent=1 // pred_fallthru
      _
    // Predicated region
    $region6: #{tpu_custom_call.1} parent=1 // pred_check
      _
    $region7: #{tpu_custom_call.1} parent=1 // pred_check_branch
      %21 = sbr.rel (0) target = $region9
    $region8: #{tpu_custom_call.1} parent=1 // pred_region
      %s23 = ssub.s32 32, 32
      %24 = vsyncadd [#allocation6], %s23
      %s26 = sshll.u32 [#allocation5], 4
      %s27 = int_to_ptr.vmem [resolvable:$true] %s26
      %29 = dma.hbm_to_vmem [thread:$0]  %s1, 32, %s27, [#allocation6]
    $region9: #{tpu_custom_call.1} parent=1 // pred_fallthru
      _
    // Predicated region
    $region10: #{tpu_custom_call.1} parent=1 // pred_check
      _
    $region11: #{tpu_custom_call.1} parent=1 // pred_check_branch
      %31 = sbr.rel (0) target = $region13
    $region12: #{tpu_custom_call.1} parent=1 // pred_region
      %32 = dma.done [#allocation3], 32
    $region13: #{tpu_custom_call.1} parent=1 // pred_fallthru
      _
    // Predicated region
    $region14: #{tpu_custom_call.1} parent=1 // pred_check
      _
    $region15: #{tpu_custom_call.1} parent=1 // pred_check_branch
      %34 = sbr.rel (0) target = $region17
    $region16: #{tpu_custom_call.1} parent=1 // pred_region
      %35 = dma.done [#allocation6], 32
    $region17: #{tpu_custom_call.1} parent=1 // pred_fallthru
      _
    %v36 = vld [vmem:[#allocation2] sm:$0x3]
    %v37 = vadd.f32 %v36, 1.0
    %v38 = vld [vmem:[#allocation5] sm:$0x3]
    %v39 = vmul.f32 %v37, %v38
    %v40 = vmax.f32 %v39, 0.0
    %vm41 = vcmask 254976
    %42 = vst.msk [vmem:[#allocation7] sm:$0x3] %vm41, %v40
    // Predicated region
    $region18: #{tpu_custom_call.1} parent=1 // pred_check
      _
    $region19: #{tpu_custom_call.1} parent=1 // pred_check_branch
      %44 = sbr.rel (0) target = $region21
    $region20: #{tpu_custom_call.1} parent=1 // pred_region
      %s46 = ssub.s32 32, 32
      %47 = vsyncadd [#allocation4], %s46
      %s49 = sshll.u32 [#allocation7], 4
      %s50 = int_to_ptr.vmem [resolvable:$true] %s49
      %52 = dma.vmem_to_hbm [thread:$0]  %s50, 32, %s2, [#allocation4]
    $region21: #{tpu_custom_call.1} parent=1 // pred_fallthru
      _
    // Predicated region
    $region22: #{tpu_custom_call.1} parent=1 // pred_check
      _
    $region23: #{tpu_custom_call.1} parent=1 // pred_check_branch
      %54 = sbr.rel (0) target = $region25
    $region24: #{tpu_custom_call.1} parent=1 // pred_region
      %55 = dma.done [#allocation4], 32
    $region25: #{tpu_custom_call.1} parent=1 // pred_fallthru
      _
    %56 = vsyncpa [#allocation3], 1
    %57 = vsyncpa [#allocation6], 1
    %58 = vsyncpa [#allocation4], 1

</llo_original>
